<compile_context>
chip_gen: v7x
topology: tpu7x:2x2x1
jax: 0.10.0
libtpu: 0.0.40
codegen_flags: <defaults>
</compile_context>

<pallas_src>
import jax
import jax.numpy as jnp
from jax.experimental import pallas as pl
from jax.experimental.pallas import tpu as pltpu

_MIB = 1024 * 1024


def _sublane(dtype) -> int:
    """Sublane packing factor: 8 for 4-byte, 16 for 2-byte, 32 for 1-byte."""
    itemsize = jnp.dtype(dtype).itemsize
    return max(8, 32 // max(itemsize, 1))


def _block_footprint_bytes(tile: int, c1: int, c2: int, dtype) -> int:
    """Double-buffered VMEM footprint of one pipeline step (x1+x2+out blocks),
    including sublane padding of the channel (second-to-last) dimension."""
    itemsize = jnp.dtype(dtype).itemsize
    sub = _sublane(dtype)
    pad = lambda c: ((c + sub - 1) // sub) * sub
    rows = pad(c1) + pad(c2) + pad(c1 + c2)
    return 2 * rows * tile * itemsize  # x2 for double buffering


def _vmem_plan():
    """Return (physical_vmem, vmem_limit_bytes, per-step tile budget)."""
    try:
        info = pltpu.get_tpu_info()
        phys = int(getattr(info, "vmem_capacity_bytes", 64 * _MIB))
    except Exception:
        phys = 64 * _MIB  # conservative (v7x-sized) fallback
    # Leave headroom below physical VMEM; 96 MiB is plenty for a copy kernel.
    # 128 MiB phys (v5e/v6e) -> 80 MiB limit / 40 MiB budget
    #  64 MiB phys (v7x)     -> 40 MiB limit / 20 MiB budget
    limit = min((phys * 5) // 8, 96 * _MIB)
    budget = limit // 2
    return phys, limit, budget


def _pick_hw_tile(hw: int, c1: int, c2: int, dtype,
                  budget_bytes: int, want_min_tiles: int) -> int:
    """Pick the lane-dim tile: prefer tile == hw (fully contiguous DMA),
    otherwise the largest 128-multiple that fits the budget; optionally split
    into >= want_min_tiles so both v7x TensorCores get work."""
    per_col = _block_footprint_bytes(1, c1, c2, dtype)
    max_cols = max(1, budget_bytes // per_col)

    if hw <= max_cols and want_min_tiles <= 1:
        return hw  # whole spatial extent: one contiguous c*hw region per DMA

    if want_min_tiles > 1 and hw >= 256:
        # Split spatially (128-multiples) so the parallel grid has >=2 steps.
        target = min(max_cols, -(-hw // want_min_tiles))
        tile = max((target // 128) * 128, 128)
        return min(tile, hw)

    if hw <= max_cols:
        return hw  # too small to split cleanly; single full-extent block

    tile = max((max_cols // 128) * 128, 128)
    return min(tile, hw)


def _make_concat_kernel(c1: int, c2: int, sub: int):
    del c2  # implicit in the ref shapes
    if c1 % sub == 0:
        # Sublane-aligned split: two static, unmasked block stores.
        def concat_kernel(x1_ref, x2_ref, o_ref):
            o_ref[:, :c1, :] = x1_ref[...]
            o_ref[:, c1:, :] = x2_ref[...]
    else:
        # Misaligned split: build the block in registers and do one full store
        # instead of a shifted/masked second store.
        def concat_kernel(x1_ref, x2_ref, o_ref):
            o_ref[...] = jnp.concatenate([x1_ref[...], x2_ref[...]], axis=1)
    return concat_kernel


def concatenate(x1: jax.Array, x2: jax.Array, *,
                min_pallas_bytes: int = 1 * _MIB) -> jax.Array:
    """Concatenate two NC... tensors along the channel dimension (dim=1)."""
    assert x1.shape[0] == x2.shape[0], "batch dims must match"
    assert x1.shape[2:] == x2.shape[2:], "spatial dims must match"
    assert x1.dtype == x2.dtype, "dtypes must match"

    if x1.ndim < 3:
        return jnp.concatenate((x1, x2), axis=1)

    n, c1 = x1.shape[0], x1.shape[1]
    c2 = x2.shape[1]
    c_out = c1 + c2
    spatial = x1.shape[2:]
    hw = 1
    for d in spatial:
        hw *= int(d)
    itemsize = jnp.dtype(x1.dtype).itemsize

    # Tiny inputs: launch + per-step overhead dominates; XLA concat is already
    # a pure DMA and wins.
    out_bytes = n * c_out * hw * itemsize
    if out_bytes < min_pallas_bytes or hw == 0:
        return jnp.concatenate((x1, x2), axis=1)

    phys, vmem_limit, tile_budget = _vmem_plan()

    # When n == 1 ensure >=2 spatial tiles so the parallel grid can shard
    # across both v7x TensorCores (harmless single extra step elsewhere).
    want_min_tiles = 2 if n == 1 else 1
    tile = _pick_hw_tile(hw, c1, c2, x1.dtype, tile_budget, want_min_tiles)

    footprint = _block_footprint_bytes(tile, c1, c2, x1.dtype)
    needed = footprint + 8 * _MIB  # headroom for Pallas metadata/scratch
    if needed > vmem_limit:
        if needed > (phys * 7) // 8:
            # TODO(synk): add a channel-tiling grid axis for c_out in the
            # tens-of-thousands instead of falling back to XLA concat.
            return jnp.concatenate((x1, x2), axis=1)
        vmem_limit = needed  # huge-channel case: cover the forced 128-wide tile

    # Lane-dense layout: contiguous per-channel spatial extent is the lane dim.
    x1f = x1.reshape(n, c1, hw)
    x2f = x2.reshape(n, c2, hw)

    grid = (n, pl.cdiv(hw, tile))
    sub = _sublane(x1.dtype)

    out_flat = pl.pallas_call(
        _make_concat_kernel(c1, c2, sub),
        out_shape=jax.ShapeDtypeStruct((n, c_out, hw), x1.dtype),
        grid_spec=pltpu.PrefetchScalarGridSpec(
            num_scalar_prefetch=0,
            grid=grid,
            in_specs=[
                pl.BlockSpec((1, c1, tile), lambda b, t: (b, 0, t)),
                pl.BlockSpec((1, c2, tile), lambda b, t: (b, 0, t)),
            ],
            out_specs=pl.BlockSpec((1, c_out, tile), lambda b, t: (b, 0, t)),
        ),
        compiler_params=pltpu.CompilerParams(
            dimension_semantics=("parallel", "parallel"),
            vmem_limit_bytes=int(vmem_limit),
        ),
    )(x1f, x2f)

    # Free row-major reshape back to NC<spatial>.
    return out_flat.reshape((n, c_out) + spatial)


if __name__ == "__main__":
    key = jax.random.PRNGKey(0)
    k1, k2, k3, k4 = jax.random.split(key, 4)

    # Small shapes consistent with a UNet skip-connection concat: NCHW.
    x1 = jax.random.normal(k1, (2, 4, 16, 16), dtype=jnp.float32)
    x2 = jax.random.normal(k2, (2, 4, 16, 16), dtype=jnp.float32)
    ref = jnp.concatenate((x1, x2), axis=1)

    # 1) Default path: tiny input short-circuits to XLA concat.
    out = jax.block_until_ready(concatenate(x1, x2))
    assert out.shape == ref.shape and out.dtype == ref.dtype
    assert bool(jnp.array_equal(out, ref))

    # 2) Same shape forced through the Pallas kernel (aligned-channel path).
    out_p = jax.block_until_ready(concatenate(x1, x2, min_pallas_bytes=0))
    assert bool(jnp.array_equal(out_p, ref))

    # 3) Non-sublane-multiple channel split -> single full-block store path.
    x1b = jax.random.normal(k3, (2, 3, 16, 16), dtype=jnp.float32)
    x2b = jax.random.normal(k4, (2, 5, 16, 16), dtype=jnp.float32)
    refb = jnp.concatenate((x1b, x2b), axis=1)
    out_b = jax.block_until_ready(concatenate(x1b, x2b, min_pallas_bytes=0))
    assert bool(jnp.array_equal(out_b, refb))

    print("KERNEL_OK")
</pallas_src>

<mosaic_0001>
module attributes {stable_mosaic.version = 11 : i64} {
  func.func @concat_kernel(%arg0: i32, %arg1: i32, %arg2: memref<1x4x256xf32, #tpu.memory_space<vmem>>, %arg3: memref<1x4x256xf32, #tpu.memory_space<vmem>>, %arg4: memref<1x8x256xf32, #tpu.memory_space<vmem>>) attributes {dimension_semantics = [#tpu.dimension_semantics<parallel>, #tpu.dimension_semantics<parallel>], iteration_bounds = array<i64: 2, 1>, scalar_prefetch = 0 : i64, scratch_operands = 0 : i64, tpu.core_type = #tpu.core_type<tc>, window_params = [{transform_indices = @transform_0, window_bounds = array<i64: 1, 4, 256>}, {transform_indices = @transform_1, window_bounds = array<i64: 1, 4, 256>}, {transform_indices = @transform_2, window_bounds = array<i64: 1, 8, 256>}]} {
    %c0 = arith.constant 0 : index
    %c0_0 = arith.constant 0 : index
    %c0_1 = arith.constant 0 : index
    %0 = vector.load %arg2[%c0, %c0_0, %c0_1] : memref<1x4x256xf32, #tpu.memory_space<vmem>>, vector<1x4x256xf32>
    %c0_2 = arith.constant 0 : index
    %c0_3 = arith.constant 0 : index
    %c0_4 = arith.constant 0 : index
    %1 = vector.load %arg3[%c0_2, %c0_3, %c0_4] : memref<1x4x256xf32, #tpu.memory_space<vmem>>, vector<1x4x256xf32>
    %2 = tpu.concatenate %0, %1 in 1 : vector<1x4x256xf32>, vector<1x4x256xf32> -> vector<1x8x256xf32>
    %c0_5 = arith.constant 0 : index
    %c0_6 = arith.constant 0 : index
    %c0_7 = arith.constant 0 : index
    %3 = vector.load %arg4[%c0_5, %c0_6, %c0_7] : memref<1x8x256xf32, #tpu.memory_space<vmem>>, vector<1x8x256xf32>
    tpu.vector_store %arg4[%c0_5, %c0_6, %c0_7], %2 {strides = array<i32>} : memref<1x8x256xf32, #tpu.memory_space<vmem>>, vector<1x8x256xf32>,
    return
  }
  func.func @transform_0(%arg0: i32, %arg1: i32) -> (i32, i32, i32) {
    %c0_i32 = arith.constant 0 : i32
    %c0_i32_0 = arith.constant 0 : i32
    return %arg0, %c0_i32, %arg1 : i32, i32, i32
  }
  func.func @transform_1(%arg0: i32, %arg1: i32) -> (i32, i32, i32) {
    %c0_i32 = arith.constant 0 : i32
    %c0_i32_0 = arith.constant 0 : i32
    return %arg0, %c0_i32, %arg1 : i32, i32, i32
  }
  func.func @transform_2(%arg0: i32, %arg1: i32) -> (i32, i32, i32) {
    %c0_i32 = arith.constant 0 : i32
    %c0_i32_0 = arith.constant 0 : i32
    return %arg0, %c0_i32, %arg1 : i32, i32, i32
  }
}

</mosaic_0001>

<llo_original>
// kernel: tpu_custom_call.1
$region0: #{tpu_custom_call.1}
  #allocation0 [shape = 'u32[]', space=smem, size = 0x4, offset = 0x4, fixed_abs, tag = 'smem constant byte address 0x4 - core index']
  #allocation1 [shape = 'u32[144,128]{1,0:T(1,128)}', space=vmem, size = 0x12000, scoped, tag = 'internal scratch']
  %s0 = inlined_call_operand.hbm [shape: f32[2,4,256], index: 0, kind: input, shape index: {}]
  %s1 = inlined_call_operand.hbm [shape: f32[2,4,256], index: 1, kind: input, shape index: {}]
  %s2 = inlined_call_operand.hbm [shape: f32[2,8,256], index: 2, kind: output, shape index: {}]
  %s3 = sld [smem:[#allocation0]]
  $region49: #{tpu_custom_call.1} parent=0
    _
  %s5 = ssub.s32 1, %s3
  %s6 = scalar_select 0, %s5, %s3
  $region1: #{tpu_custom_call.1} parent=0
    #allocation2 [shape = 'u8[8192]{0}', space=vmem, size = 0x2000, scoped, tag = 'input window, operand 0']
    #allocation3 [shape = 's32[2]{0}', space=sflag, size = 0x8, scoped, tag = 'scoped memory for tpu_custom_call.1']
    #allocation4 [shape = 's32[2]{0}', space=sflag, size = 0x8, scoped, tag = 'scoped memory for tpu_custom_call.1']
    #allocation5 [shape = 'u8[8192]{0}', space=vmem, size = 0x2000, scoped, tag = 'input window, operand 1']
    #allocation6 [shape = 's32[2]{0}', space=sflag, size = 0x8, scoped, tag = 'scoped memory for tpu_custom_call.1']
    #allocation7 [shape = 'u8[16384]{0}', space=vmem, size = 0x4000, scoped, tag = 'output window, operand 0']
    %7 = vsyncpa [#allocation3], 0
    %s8 = scalar_lea.sflag [#allocation3], 1
    %9 = vsyncpa %s8, 0
    %10 = vsyncpa [#allocation6], 0
    %s11 = scalar_lea.sflag [#allocation6], 1
    %12 = vsyncpa %s11, 0
    %13 = vsyncpa [#allocation4], 0
    %s14 = scalar_lea.sflag [#allocation4], 1
    %15 = vsyncpa %s14, 0
    loop: start=0, step=1, limit=4
    $region2: #{tpu_custom_call.1} parent=1 // loop_pre_header
      _
    $region3: #{tpu_custom_call.1} parent=1 // loop_header
      %s17 = sphi 0, %s21
      %p18 = scmp.ge.s32.totalorder %s17, 4
      %s24 = sphi 0, %s36
      %s25 = sphi 0, %s32
      %s26 = sphi 0, %s24
      %s27 = sphi 0, %s25
      %s28 = sphi 0, %s26
      %s29 = sphi 0, %s27
      %s41 = sphi 0, %s43
      %s44 = sphi 0, %s41
      %s45 = sphi 0, %s44
      %s61 = sphi 0, %s45
      %s69 = sphi 0, %s71
      %s72 = sphi 0, %s69
      %s73 = sphi 0, %s72
      %s89 = sphi 0, %s73
      %s97 = sphi 0, %s99
      %s100 = sphi 0, %s97
      %s101 = sphi 0, %s100
      %s117 = sphi 0, %s101
    $region4: #{tpu_custom_call.1} parent=1 // loop_header_branch
      %20 = sbr.rel (%p18) target = $region8
    $region5: #{tpu_custom_call.1} parent=1 // loop_body
      %s22 = ssub.s32 %s17, 1
      %s23 = ssub.s32 %s17, 2
      %s30 = sadd.s32 1, %s25
      %p31 = scmp.ge.s32.totalorder %s30, 1
      %s32 = scalar_select %p31, 0, %s30
      %s33 = sadd.s32 1, %s24
      %s34 = scalar_select %p31, %s33, %s24
      %p35 = scmp.ge.s32.totalorder %s34, 2
      %s36 = scalar_select %p35, 0, %s34
      %s37 = ssub.s32 %s24, %s36
      %s38 = ssub.s32 %s25, %s32
      %s39 = sor.u32 %s37, %s38
      %p40 = scmp.eq.s32.totalorder %s39, 0
      %s42 = sadd.s32 %s41, 1
      %s43 = scalar_select %p40, %s41, %s42
      %p46 = pneg %p40
      %p47 = scmp.eq.s32.totalorder %s17, 1
      %p48 = por %p46, %p47
      %p49 = scmp.ne.s32.totalorder %s41, %s44
      %p50 = scmp.eq.s32.totalorder %s17, 0
      %p51 = por %p49, %p50
      %p52 = scmp.ne.s32.totalorder %s41, %s44
      %p53 = scmp.eq.s32.totalorder %s22, 1
      %p54 = por %p52, %p53
      %p55 = scmp.ne.s32.totalorder %s44, %s45
      %p56 = scmp.eq.s32.totalorder %s22, 0
      %p57 = por %p55, %p56
      %p58 = scmp.ne.s32.totalorder %s44, %s45
      %p59 = scmp.eq.s32.totalorder %s23, 1
      %p60 = por %p58, %p59
      %p62 = scmp.ne.s32.totalorder %s45, %s61
      %p63 = scmp.eq.s32.totalorder %s23, 0
      %p64 = por %p62, %p63
      %s65 = ssub.s32 %s24, %s36
      %s66 = ssub.s32 %s25, %s32
      %s67 = sor.u32 %s65, %s66
      %p68 = scmp.eq.s32.totalorder %s67, 0
      %s70 = sadd.s32 %s69, 1
      %s71 = scalar_select %p68, %s69, %s70
      %p74 = pneg %p68
      %p75 = scmp.eq.s32.totalorder %s17, 1
      %p76 = por %p74, %p75
      %p77 = scmp.ne.s32.totalorder %s69, %s72
      %p78 = scmp.eq.s32.totalorder %s17, 0
      %p79 = por %p77, %p78
      %p80 = scmp.ne.s32.totalorder %s69, %s72
      %p81 = scmp.eq.s32.totalorder %s22, 1
      %p82 = por %p80, %p81
      %p83 = scmp.ne.s32.totalorder %s72, %s73
      %p84 = scmp.eq.s32.totalorder %s22, 0
      %p85 = por %p83, %p84
      %p86 = scmp.ne.s32.totalorder %s72, %s73
      %p87 = scmp.eq.s32.totalorder %s23, 1
      %p88 = por %p86, %p87
      %p90 = scmp.ne.s32.totalorder %s73, %s89
      %p91 = scmp.eq.s32.totalorder %s23, 0
      %p92 = por %p90, %p91
      %s93 = ssub.s32 %s24, %s36
      %s94 = ssub.s32 %s25, %s32
      %s95 = sor.u32 %s93, %s94
      %p96 = scmp.eq.s32.totalorder %s95, 0
      %s98 = sadd.s32 %s97, 1
      %s99 = scalar_select %p96, %s97, %s98
      %p102 = pneg %p96
      %p103 = scmp.eq.s32.totalorder %s17, 1
      %p104 = por %p102, %p103
      %p105 = scmp.ne.s32.totalorder %s97, %s100
      %p106 = scmp.eq.s32.totalorder %s17, 0
      %p107 = por %p105, %p106
      %p108 = scmp.ne.s32.totalorder %s97, %s100
      %p109 = scmp.eq.s32.totalorder %s22, 1
      %p110 = por %p108, %p109
      %p111 = scmp.ne.s32.totalorder %s100, %s101
      %p112 = scmp.eq.s32.totalorder %s22, 0
      %p113 = por %p111, %p112
      %p114 = scmp.ne.s32.totalorder %s100, %s101
      %p115 = scmp.eq.s32.totalorder %s23, 1
      %p116 = por %p114, %p115
      %p118 = scmp.ne.s32.totalorder %s101, %s117
      %p119 = scmp.eq.s32.totalorder %s23, 0
      %p120 = por %p118, %p119
      %p121 = scmp.le.s32.totalorder 1, %s17
      %p122 = scmp.lt.s32.totalorder %s17, 3
      %p123 = pnand %p121, %p122
      %p124 = pneg %p123
      // Predicated region
      $region9: #{tpu_custom_call.1} parent=5 // pred_check
        _
      $region10: #{tpu_custom_call.1} parent=5 // pred_check_branch
        %126 = sbr.rel (%p123) target = $region12
      $region11: #{tpu_custom_call.1} parent=5 // pred_region
        %s127 = ssub.s32 %s17, 1
      $region12: #{tpu_custom_call.1} parent=5 // pred_fallthru
        _
      %p128 = scmp.lt.s32.totalorder %s17, 2
      // Predicated region
      $region13: #{tpu_custom_call.1} parent=5 // pred_check
        %p129 = pneg %p128
      $region14: #{tpu_custom_call.1} parent=5 // pred_check_branch
        %131 = sbr.rel (%p129) target = $region16
      $region15: #{tpu_custom_call.1} parent=5 // pred_region
        // Predicated region
        $region17: #{tpu_custom_call.1} parent=15 // pred_check
          %p132 = pneg %p51
        $region18: #{tpu_custom_call.1} parent=15 // pred_check_branch
          %134 = sbr.rel (%p132) target = $region20
        $region19: #{tpu_custom_call.1} parent=15 // pred_region
          %s135 = sand.u32 %s41, 1
          %s136 = scalar_lea.sflag [#allocation3], %s135
          %s137 = sand.u32 %s41, 1
          %s138 = smul.addr %s137, 8
          %s139 = scalar_lea.vmem [#allocation2], %s138
          %s140 = smul.u32 2, %s25
          %s142 = ssub.s32 128, 128
          %143 = vsyncadd %s136, %s142
          %s144 = smul.addr %s24, 2
          %s145 = sadd.s32 %s140, %s144
          %s146 = smul.addr %s145, 64
          %s147 = scalar_lea.hbm %s0, %s146
          %s149 = sshll.u32 %s139, 4
          %s150 = int_to_ptr.vmem [resolvable:$true] %s149
          %152 = dma.hbm_to_vmem [thread:$0]  %s147, 128, %s150, %s136
        $region20: #{tpu_custom_call.1} parent=15 // pred_fallthru
          _
        // Predicated region
        $region21: #{tpu_custom_call.1} parent=15 // pred_check
          %p153 = pneg %p79
        $region22: #{tpu_custom_call.1} parent=15 // pred_check_branch
          %155 = sbr.rel (%p153) target = $region24
        $region23: #{tpu_custom_call.1} parent=15 // pred_region
          %s156 = sand.u32 %s69, 1
          %s157 = scalar_lea.sflag [#allocation6], %s156
          %s158 = sand.u32 %s69, 1
          %s159 = smul.addr %s158, 8
          %s160 = scalar_lea.vmem [#allocation5], %s159
          %s161 = smul.u32 2, %s25
          %s163 = ssub.s32 128, 128
          %164 = vsyncadd %s157, %s163
          %s165 = smul.addr %s24, 2
          %s166 = sadd.s32 %s161, %s165
          %s167 = smul.addr %s166, 64
          %s168 = scalar_lea.hbm %s1, %s167
          %s170 = sshll.u32 %s160, 4
          %s171 = int_to_ptr.vmem [resolvable:$true] %s170
          %173 = dma.hbm_to_vmem [thread:$0]  %s168, 128, %s171, %s157
        $region24: #{tpu_custom_call.1} parent=15 // pred_fallthru
          _
      $region16: #{tpu_custom_call.1} parent=5 // pred_fallthru
        _
      %p174 = scmp.le.s32.totalorder 1, %s17
      %p175 = scmp.lt.s32.totalorder %s17, 3
      %p176 = pnand %p174, %p175
      %p177 = pneg %p176
      // Predicated region
      $region25: #{tpu_custom_call.1} parent=5 // pred_check
        _
      $region26: #{tpu_custom_call.1} parent=5 // pred_check_branch
        %179 = sbr.rel (%p176) target = $region28
      $region27: #{tpu_custom_call.1} parent=5 // pred_region
        %s180 = ssub.s32 %s17, 1
        %s181 = sand.u32 %s44, 1
        %s182 = scalar_lea.sflag [#allocation3], %s181
        %s183 = sand.u32 %s44, 1
        %s184 = smul.addr %s183, 8
        %s185 = scalar_lea.vmem [#allocation2], %s184
        // Predicated region
        $region29: #{tpu_custom_call.1} parent=27 // pred_check
          %p186 = pneg %p57
        $region30: #{tpu_custom_call.1} parent=27 // pred_check_branch
          %188 = sbr.rel (%p186) target = $region32
        $region31: #{tpu_custom_call.1} parent=27 // pred_region
          %189 = dma.done %s182, 128
        $region32: #{tpu_custom_call.1} parent=27 // pred_fallthru
          _
        %s190 = sand.u32 %s72, 1
        %s191 = scalar_lea.sflag [#allocation6], %s190
        %s192 = sand.u32 %s72, 1
        %s193 = smul.addr %s192, 8
        %s194 = scalar_lea.vmem [#allocation5], %s193
        // Predicated region
        $region33: #{tpu_custom_call.1} parent=27 // pred_check
          %p195 = pneg %p85
        $region34: #{tpu_custom_call.1} parent=27 // pred_check_branch
          %197 = sbr.rel (%p195) target = $region36
        $region35: #{tpu_custom_call.1} parent=27 // pred_region
          %198 = dma.done %s191, 128
        $region36: #{tpu_custom_call.1} parent=27 // pred_fallthru
          _
        %s199 = sand.u32 %s44, 1
        %s200 = scalar_lea.sflag [#allocation3], %s199
        %s201 = sand.u32 %s44, 1
        %s202 = smul.addr %s201, 8
        %s203 = scalar_lea.vmem [#allocation2], %s202
        %p204 = pneg %p57
        %p205 = pneg %p54
        %s206 = sand.u32 %s72, 1
        %s207 = scalar_lea.sflag [#allocation6], %s206
        %s208 = sand.u32 %s72, 1
        %s209 = smul.addr %s208, 8
        %s210 = scalar_lea.vmem [#allocation5], %s209
        %p211 = pneg %p85
        %p212 = pneg %p82
        %p213 = pneg %p113
        %p214 = pneg %p110
        %s215 = sand.u32 %s100, 1
        %s216 = scalar_lea.sflag [#allocation4], %s215
        %s217 = sand.u32 %s100, 1
        %s218 = smul.addr %s217, 16
        %s219 = scalar_lea.vmem [#allocation7], %s218
        %s220 = smul.u32 2, %s27
        %s221 = smul.u32 2, %s27
        %s222 = smul.u32 2, %s27
        %v223 = vld [vmem:[%s185] sm:$0xff]
        %v224 = vld [vmem:[%s194] sm:$0xff]
        %v226 = vcombine.high %v223, %v223
        %v229 = vcombine.low %v224, %v224
        %vm231 = vcmask 1043456
        %v232 = vsel %vm231, %v223, %v229
        %v233 = vsel %vm231, %v226, %v224
        %234 = vst [vmem:[%s219] sm:$0xff] %v232
        %235 = vst [vmem:[%s219 + $0x8] sm:$0xff] %v233
        %s236 = sand.u32 %s100, 1
        %s237 = scalar_lea.sflag [#allocation4], %s236
        %s238 = sand.u32 %s100, 1
        %s239 = smul.addr %s238, 16
        %s240 = scalar_lea.vmem [#allocation7], %s239
        // Predicated region
        $region37: #{tpu_custom_call.1} parent=27 // pred_check
          %p241 = pneg %p110
        $region38: #{tpu_custom_call.1} parent=27 // pred_check_branch
          %243 = sbr.rel (%p241) target = $region40
        $region39: #{tpu_custom_call.1} parent=27 // pred_region
          %s244 = smul.u32 2, %s27
          %s246 = ssub.s32 256, 256
          %247 = vsyncadd %s237, %s246
          %s248 = smul.addr %s26, 2
          %s249 = sadd.s32 %s244, %s248
          %s250 = smul.addr %s249, 128
          %s251 = scalar_lea.hbm %s2, %s250
          %s253 = sshll.u32 %s240, 4
          %s254 = int_to_ptr.vmem [resolvable:$true] %s253
          %256 = dma.vmem_to_hbm [thread:$0]  %s254, 256, %s251, %s237
        $region40: #{tpu_custom_call.1} parent=27 // pred_fallthru
          _
      $region28: #{tpu_custom_call.1} parent=5 // pred_fallthru
        _
      %p257 = scmp.le.s32.totalorder 2, %s17
      // Predicated region
      $region41: #{tpu_custom_call.1} parent=5 // pred_check
        %p258 = pneg %p257
      $region42: #{tpu_custom_call.1} parent=5 // pred_check_branch
        %260 = sbr.rel (%p258) target = $region44
      $region43: #{tpu_custom_call.1} parent=5 // pred_region
        %s261 = ssub.s32 %s17, 2
        // Predicated region
        $region45: #{tpu_custom_call.1} parent=43 // pred_check
          %p262 = pneg %p116
        $region46: #{tpu_custom_call.1} parent=43 // pred_check_branch
          %264 = sbr.rel (%p262) target = $region48
        $region47: #{tpu_custom_call.1} parent=43 // pred_region
          %s265 = sand.u32 %s101, 1
          %s266 = scalar_lea.sflag [#allocation4], %s265
          %s267 = sand.u32 %s101, 1
          %s268 = smul.addr %s267, 16
          %s269 = scalar_lea.vmem [#allocation7], %s268
          %270 = dma.done %s266, 256
        $region48: #{tpu_custom_call.1} parent=43 // pred_fallthru
          _
      $region44: #{tpu_custom_call.1} parent=5 // pred_fallthru
        _
    $region6: #{tpu_custom_call.1} parent=1 // loop_footer
      %s21 = sadd.s32 1, %s17
    $region7: #{tpu_custom_call.1} parent=1 // loop_footer_branch
      %16 = sbr.rel target = $region3
    $region8: #{tpu_custom_call.1} parent=1 // loop_exit
      _
    %271 = vsyncpa [#allocation3], 1
    %s272 = scalar_lea.sflag [#allocation3], 1
    %273 = vsyncpa %s272, 1
    %274 = vsyncpa [#allocation6], 1
    %s275 = scalar_lea.sflag [#allocation6], 1
    %276 = vsyncpa %s275, 1
    %277 = vsyncpa [#allocation4], 1
    %s278 = scalar_lea.sflag [#allocation4], 1
    %279 = vsyncpa %s278, 1

</llo_original>
